<compile_context>
chip_gen: v6e
topology: v6e:2x2x1
jax: 0.10.0
libtpu: 0.0.40
codegen_flags: <defaults>
</compile_context>

<pallas_src>
import jax
import jax.numpy as jnp
from jax.experimental import pallas as pl
from jax.experimental.pallas import tpu as pltpu


def _round_up(n, m):
    return ((n + m - 1) // m) * m


def mlp_kernel(x_ref, w1_ref, b1_ref, wf_ref, bf_ref, out_ref):
    # fc1 (transposed): [128, D] @ [D, tb] -> [128, tb], f32 accumulation on MXU.
    h = jnp.dot(w1_ref[...], x_ref[...], preferred_element_type=jnp.float32)
    # bias + ReLU (f32, VPU).  BN/fc2/fc3 are folded into (wf, bf) at prep time.
    h = jnp.maximum(h + b1_ref[...], 0.0)
    # folded fc2∘fc3 (with BN affine): [1, 128] @ [128, tb] -> [1, tb] (lane-dense).
    out_ref[...] = (
        jnp.dot(wf_ref[...], h, preferred_element_type=jnp.float32) + bf_ref[0]
    )


def neural_network_forward(x, kernel_params, *, tb=512):
    """Fused eval-mode forward.  x: [B, num_inputs] float32 -> [B, 1] float32."""
    w1_t, b1_col, wf_row, bf = kernel_params
    B, D = x.shape

    # Batch tile: big (default 512), multiple of 128, no bigger than needed.
    tb_eff = min(tb, _round_up(B, 128))
    tb_eff = _round_up(tb_eff, 128)
    B_pad = _round_up(B, tb_eff)

    # Lane-dense input layout: batch on the lane (last) dim.  Cast to the matmul
    # operand dtype (bf16 on v6e/v7x for ~2x MXU / HBM win, f32 otherwise).
    x_t = x.T.astype(w1_t.dtype)                      # [D, B]
    if B_pad != B:
        x_t = jnp.pad(x_t, ((0, 0), (0, B_pad - B)))  # [D, B_pad]

    grid = (B_pad // tb_eff,)

    out = pl.pallas_call(
        mlp_kernel,
        out_shape=jax.ShapeDtypeStruct((1, B_pad), jnp.float32),
        grid_spec=pltpu.PrefetchScalarGridSpec(
            num_scalar_prefetch=0,
            grid=grid,
            in_specs=[
                pl.BlockSpec((D, tb_eff), lambda i: (0, i)),   # x tile [D, tb]
                pl.BlockSpec((128, D), lambda i: (0, 0)),      # W1^T (resident)
                pl.BlockSpec((128, 1), lambda i: (0, 0)),      # b1 column
                pl.BlockSpec((1, 128), lambda i: (0, 0)),      # folded w_f row
                pl.BlockSpec(memory_space=pltpu.MemorySpace.SMEM),  # b_f scalar
            ],
            out_specs=pl.BlockSpec((1, tb_eff), lambda i: (0, i)),  # lane-dense out
        ),
        compiler_params=pltpu.CompilerParams(
            dimension_semantics=("parallel",)),
    )(x_t, w1_t, b1_col, wf_row, bf)

    # [1, B_pad] -> [B, 1]
    return out[0, :B].reshape(B, 1)


def init_params(num_inputs, key):
    """Raw parameters matching the PyTorch module (Linear weights stored [in, out])."""
    k1, k2, k3, k4, k5, k6, k7, k8, k9, k10 = jax.random.split(key, 10)

    def linear_init(kw, kb, fan_in, fan_out):
        bound = 1.0 / jnp.sqrt(jnp.float32(fan_in))
        w = jax.random.uniform(kw, (fan_in, fan_out), jnp.float32, -bound, bound)
        b = jax.random.uniform(kb, (fan_out,), jnp.float32, -bound, bound)
        return w, b

    w1, b1 = linear_init(k1, k2, num_inputs, 128)
    w2, b2 = linear_init(k3, k4, 128, 64)
    w3, b3 = linear_init(k5, k6, 64, 1)

    # Non-trivial BatchNorm1d(128) stats so the folding is actually exercised.
    gamma = jax.random.uniform(k7, (128,), jnp.float32, 0.5, 1.5)
    beta = 0.1 * jax.random.normal(k8, (128,), jnp.float32)
    running_mean = 0.1 * jax.random.normal(k9, (128,), jnp.float32)
    running_var = jax.random.uniform(k10, (128,), jnp.float32, 0.5, 1.5)

    return (w1, b1, gamma, beta, running_mean, running_var, w2, b2, w3, b3)


def prepare_kernel_params(raw_params, *, eps=1e-5, use_bf16=True):
    """Fold BN (eval mode) into fc2 and collapse fc2∘fc3 into (w_f, b_f)."""
    w1, b1, gamma, beta, mean, var, w2, b2, w3, b3 = raw_params
    scale = gamma / jnp.sqrt(var + eps)          # [128]
    shift = beta - mean * scale                  # [128]
    w_f = (scale[:, None] * w2) @ w3             # [128, 1]
    b_f = (shift @ w2 + b2) @ w3 + b3            # [1]

    mat_dtype = jnp.bfloat16 if use_bf16 else jnp.float32
    w1_t = w1.T.astype(mat_dtype)                        # [128, D]
    b1_col = b1.reshape(128, 1).astype(jnp.float32)      # [128, 1]
    wf_row = w_f.T.astype(jnp.float32)                   # [1, 128]
    bf = b_f.reshape(1).astype(jnp.float32)              # [1] (SMEM scalar)
    return (w1_t, b1_col, wf_row, bf)


def reference_forward(x, raw_params, *, eps=1e-5, use_bf16=False):
    """Unfused eval-mode forward of the PyTorch module (dropout = identity)."""
    w1, b1, gamma, beta, mean, var, w2, b2, w3, b3 = raw_params
    if use_bf16:
        h = jnp.dot(x.astype(jnp.bfloat16), w1.astype(jnp.bfloat16),
                    preferred_element_type=jnp.float32)
    else:
        h = x @ w1
    h = jnp.maximum(h + b1, 0.0)
    scale = gamma / jnp.sqrt(var + eps)
    shift = beta - mean * scale
    h = h * scale + shift
    h = h @ w2 + b2
    return h @ w3 + b3


if __name__ == "__main__":
    num_inputs = 32
    batch = 16

    key = jax.random.PRNGKey(0)
    kx, kp = jax.random.split(key)
    x = jax.random.normal(kx, (batch, num_inputs), dtype=jnp.float32)
    raw = init_params(num_inputs, kp)

    # 1) f32 matmul path: exact check against the unfused reference.
    p_f32 = prepare_kernel_params(raw, use_bf16=False)
    out_f32 = jax.block_until_ready(neural_network_forward(x, p_f32))
    ref_f32 = reference_forward(x, raw, use_bf16=False)
    assert out_f32.shape == (batch, 1)
    assert jnp.allclose(out_f32, ref_f32, atol=1e-4, rtol=1e-4)

    # 2) bf16 fc1-operand path (perf default for v6e/v7x), checked against a
    #    reference that applies the same fc1 cast.
    p_bf16 = prepare_kernel_params(raw, use_bf16=True)
    out_bf16 = jax.block_until_ready(neural_network_forward(x, p_bf16))
    ref_bf16 = reference_forward(x, raw, use_bf16=True)
    assert out_bf16.shape == (batch, 1)
    assert jnp.allclose(out_bf16, ref_bf16, atol=2e-3, rtol=2e-3)

    print("KERNEL_OK")
</pallas_src>

<mosaic_0001>
module attributes {stable_mosaic.version = 11 : i64} {
  func.func @mlp_kernel(%arg0: i32, %arg1: memref<32x128xf32, #tpu.memory_space<vmem>>, %arg2: memref<128x32xf32, #tpu.memory_space<vmem>>, %arg3: memref<128x1xf32, #tpu.memory_space<vmem>>, %arg4: memref<1x128xf32, #tpu.memory_space<vmem>>, %arg5: memref<1xf32, #tpu.memory_space<smem>>, %arg6: memref<1x128xf32, #tpu.memory_space<vmem>>) attributes {dimension_semantics = [#tpu.dimension_semantics<parallel>], iteration_bounds = array<i64: 1>, scalar_prefetch = 0 : i64, scratch_operands = 0 : i64, tpu.core_type = #tpu.core_type<tc>, window_params = [{transform_indices = @transform_0, window_bounds = array<i64: 32, 128>}, {pipeline_mode = #tpu.pipeline_mode<synchronous>, transform_indices = @transform_1, window_bounds = array<i64: 128, 32>}, {pipeline_mode = #tpu.pipeline_mode<synchronous>, transform_indices = @transform_2, window_bounds = array<i64: 128, 1>}, {pipeline_mode = #tpu.pipeline_mode<synchronous>, transform_indices = @transform_3, window_bounds = array<i64: 1, 128>}, {transform_indices = @transform_4, window_bounds = array<i64: 1>}, {transform_indices = @transform_5, window_bounds = array<i64: 1, 128>}]} {
    %c0 = arith.constant 0 : index
    %c0_0 = arith.constant 0 : index
    %0 = vector.load %arg2[%c0, %c0_0] : memref<128x32xf32, #tpu.memory_space<vmem>>, vector<128x32xf32>
    %c0_1 = arith.constant 0 : index
    %c0_2 = arith.constant 0 : index
    %1 = vector.load %arg1[%c0_1, %c0_2] : memref<32x128xf32, #tpu.memory_space<vmem>>, vector<32x128xf32>
    %cst = arith.constant dense<0.000000e+00> : vector<128x128xf32>
    %2 = tpu.matmul %0, %1, %cst {dimension_numbers = #tpu.dot_dimension_numbers<[1], [0], [0], [1], [0, 0, 1, 1], [], []>} : vector<128x32xf32>, vector<32x128xf32>, vector<128x128xf32> -> vector<128x128xf32>
    %c0_3 = arith.constant 0 : index
    %c0_4 = arith.constant 0 : index
    %3 = vector.load %arg3[%c0_3, %c0_4] : memref<128x1xf32, #tpu.memory_space<vmem>>, vector<128x1xf32>
    %4 = vector.broadcast %3 : vector<128x1xf32> to vector<128x128xf32>
    %5 = arith.addf %2, %4 : vector<128x128xf32>
    %cst_5 = arith.constant 0.000000e+00 : f32
    %6 = vector.broadcast %cst_5 : f32 to vector<128x128xf32>
    %7 = arith.maximumf %5, %6 : vector<128x128xf32>
    %c0_6 = arith.constant 0 : index
    %c0_7 = arith.constant 0 : index
    %8 = vector.load %arg4[%c0_6, %c0_7] : memref<1x128xf32, #tpu.memory_space<vmem>>, vector<1x128xf32>
    %cst_8 = arith.constant dense<0.000000e+00> : vector<1x128xf32>
    %9 = tpu.matmul %8, %7, %cst_8 {dimension_numbers = #tpu.dot_dimension_numbers<[1], [0], [0], [1], [0, 0, 1, 1], [], []>} : vector<1x128xf32>, vector<128x128xf32>, vector<1x128xf32> -> vector<1x128xf32>
    %c0_9 = arith.constant 0 : index
    %10 = memref.load %arg5[%c0_9] : memref<1xf32, #tpu.memory_space<smem>>
    %11 = vector.broadcast %10 : f32 to vector<1x128xf32>
    %12 = arith.addf %9, %11 : vector<1x128xf32>
    %c0_10 = arith.constant 0 : index
    %c0_11 = arith.constant 0 : index
    %13 = vector.load %arg6[%c0_10, %c0_11] : memref<1x128xf32, #tpu.memory_space<vmem>>, vector<1x128xf32>
    tpu.vector_store %arg6[%c0_10, %c0_11], %12 {strides = array<i32>} : memref<1x128xf32, #tpu.memory_space<vmem>>, vector<1x128xf32>,
    return
  }
  func.func @transform_0(%arg0: i32) -> (i32, i32) {
    %c0_i32 = arith.constant 0 : i32
    %c0_i32_0 = arith.constant 0 : i32
    return %c0_i32, %arg0 : i32, i32
  }
  func.func @transform_1(%arg0: i32) -> (i32, i32) {
    %c0_i32 = arith.constant 0 : i32
    %c0_i32_0 = arith.constant 0 : i32
    %c0_i32_1 = arith.constant 0 : i32
    return %c0_i32, %c0_i32_0 : i32, i32
  }
  func.func @transform_2(%arg0: i32) -> (i32, i32) {
    %c0_i32 = arith.constant 0 : i32
    %c0_i32_0 = arith.constant 0 : i32
    %c0_i32_1 = arith.constant 0 : i32
    return %c0_i32, %c0_i32_0 : i32, i32
  }
  func.func @transform_3(%arg0: i32) -> (i32, i32) {
    %c0_i32 = arith.constant 0 : i32
    %c0_i32_0 = arith.constant 0 : i32
    %c0_i32_1 = arith.constant 0 : i32
    return %c0_i32, %c0_i32_0 : i32, i32
  }
  func.func @transform_4(%arg0: i32) -> i32 {
    %c0_i32 = arith.constant 0 : i32
    %c0_i32_0 = arith.constant 0 : i32
    return %c0_i32 : i32
  }
  func.func @transform_5(%arg0: i32) -> (i32, i32) {
    %c0_i32 = arith.constant 0 : i32
    %c0_i32_0 = arith.constant 0 : i32
    return %c0_i32, %arg0 : i32, i32
  }
}

</mosaic_0001>

<llo_original>
// kernel: tpu_custom_call.1
$region0: #{tpu_custom_call.1}
  #allocation0 [shape = 'u32[]', space=smem, size = 0x4, offset = 0x4, fixed_abs, tag = 'smem constant byte address 0x4 - core index']
  #allocation1 [shape = 'u32[144,128]{1,0:T(1,128)}', space=vmem, size = 0x12000, scoped, tag = 'internal scratch']
  #allocation2 [shape = 'f32[1]{0:T(128)S(6)}', space=smem, size = 0x200, scoped, tag = 'scoped memory for tpu_custom_call.1']
  %s0 = inlined_call_operand.vmem [shape: f32[32,128], index: 0, kind: input, shape index: {}]
  %s1 = inlined_call_operand.vmem [shape: f32[128,32], index: 1, kind: input, shape index: {}]
  %s2 = inlined_call_operand.vmem [shape: f32[128,1], index: 2, kind: input, shape index: {}]
  %s3 = inlined_call_operand.vmem [shape: f32[1,128], index: 3, kind: input, shape index: {}]
  %s4 = inlined_call_operand.<no memory space> [shape: f32[1], index: 4, kind: input, shape index: {}]
  %s5 = inlined_call_operand.hbm [shape: f32[1,128], index: 5, kind: output, shape index: {}]
  %s6 = sld [smem:[#allocation0]]
  $region30: #{tpu_custom_call.1} parent=0
    _
  %s8 = ssub.s32 1, %s6
  %s9 = scalar_select 0, %s8, %s6
  %10 = sst [smem:[#allocation2]] %s4
  $region1: #{tpu_custom_call.1} parent=0
    #allocation3 [shape = 'u8[512]{0}', space=vmem, size = 0x400, scoped, tag = 'output window, operand 0, single buffered']
    #allocation4 [shape = 's32[1]{0}', space=sflag, size = 0x4, scoped, tag = 'scoped memory for tpu_custom_call.1']
    %11 = vsyncpa [#allocation4], 0
    // Predicated region
    $region2: #{tpu_custom_call.1} parent=1 // pred_check
      _
    $region3: #{tpu_custom_call.1} parent=1 // pred_check_branch
      %13 = sbr.rel (0) target = $region5
    $region4: #{tpu_custom_call.1} parent=1 // pred_region
      _
    $region5: #{tpu_custom_call.1} parent=1 // pred_fallthru
      _
    // Predicated region
    $region6: #{tpu_custom_call.1} parent=1 // pred_check
      _
    $region7: #{tpu_custom_call.1} parent=1 // pred_check_branch
      %15 = sbr.rel (0) target = $region9
    $region8: #{tpu_custom_call.1} parent=1 // pred_region
      _
    $region9: #{tpu_custom_call.1} parent=1 // pred_fallthru
      _
    // Predicated region
    $region10: #{tpu_custom_call.1} parent=1 // pred_check
      _
    $region11: #{tpu_custom_call.1} parent=1 // pred_check_branch
      %17 = sbr.rel (0) target = $region13
    $region12: #{tpu_custom_call.1} parent=1 // pred_region
      _
    $region13: #{tpu_custom_call.1} parent=1 // pred_fallthru
      _
    // Predicated region
    $region14: #{tpu_custom_call.1} parent=1 // pred_check
      _
    $region15: #{tpu_custom_call.1} parent=1 // pred_check_branch
      %19 = sbr.rel (0) target = $region17
    $region16: #{tpu_custom_call.1} parent=1 // pred_region
      _
    $region17: #{tpu_custom_call.1} parent=1 // pred_fallthru
      _
    // Predicated region
    $region18: #{tpu_custom_call.1} parent=1 // pred_check
      _
    $region19: #{tpu_custom_call.1} parent=1 // pred_check_branch
      %21 = sbr.rel (0) target = $region21
    $region20: #{tpu_custom_call.1} parent=1 // pred_region
      _
    $region21: #{tpu_custom_call.1} parent=1 // pred_fallthru
      _
    %v22 = vld [vmem:[%s1] sm:$0xff]
    %v23 = vld [vmem:[%s1 + $0x8] sm:$0xff]
    %v24 = vld [vmem:[%s1 + $0x10] sm:$0xff]
    %v25 = vld [vmem:[%s1 + $0x18] sm:$0xff]
    %v26 = vld [vmem:[%s1 + $0x20] sm:$0xff]
    %v27 = vld [vmem:[%s1 + $0x28] sm:$0xff]
    %v28 = vld [vmem:[%s1 + $0x30] sm:$0xff]
    %v29 = vld [vmem:[%s1 + $0x38] sm:$0xff]
    %v30 = vld [vmem:[%s1 + $0x40] sm:$0xff]
    %v31 = vld [vmem:[%s1 + $0x48] sm:$0xff]
    %v32 = vld [vmem:[%s1 + $0x50] sm:$0xff]
    %v33 = vld [vmem:[%s1 + $0x58] sm:$0xff]
    %v34 = vld [vmem:[%s1 + $0x60] sm:$0xff]
    %v35 = vld [vmem:[%s1 + $0x68] sm:$0xff]
    %v36 = vld [vmem:[%s1 + $0x70] sm:$0xff]
    %v37 = vld [vmem:[%s1 + $0x78] sm:$0xff]
    %v38 = vld [vmem:[%s0] sm:$0xff]
    %v39 = vld [vmem:[%s0 + $0x8] sm:$0xff]
    %v40 = vld [vmem:[%s0 + $0x10] sm:$0xff]
    %v41 = vld [vmem:[%s0 + $0x18] sm:$0xff]
    %v42 = vld [vmem:[%s2] sm:$0xff]
    %v43 = vld [vmem:[%s2 + $0x8] sm:$0xff]
    %v44 = vld [vmem:[%s2 + $0x10] sm:$0xff]
    %v45 = vld [vmem:[%s2 + $0x18] sm:$0xff]
    %v46 = vld [vmem:[%s2 + $0x20] sm:$0xff]
    %v47 = vld [vmem:[%s2 + $0x28] sm:$0xff]
    %v48 = vld [vmem:[%s2 + $0x30] sm:$0xff]
    %v49 = vld [vmem:[%s2 + $0x38] sm:$0xff]
    %v50 = vld [vmem:[%s2 + $0x40] sm:$0xff]
    %v51 = vld [vmem:[%s2 + $0x48] sm:$0xff]
    %v52 = vld [vmem:[%s2 + $0x50] sm:$0xff]
    %v53 = vld [vmem:[%s2 + $0x58] sm:$0xff]
    %v54 = vld [vmem:[%s2 + $0x60] sm:$0xff]
    %v55 = vld [vmem:[%s2 + $0x68] sm:$0xff]
    %v56 = vld [vmem:[%s2 + $0x70] sm:$0xff]
    %v57 = vld [vmem:[%s2 + $0x78] sm:$0xff]
    %59 = vset.pattern.permute.xlu0 0
    %60 = vperm.xlu0 %59, %v42
    %v61 = vpop.permute.xlu0 %60
    %64 = vset.pattern.permute.xlu0 0
    %65 = vperm.xlu0 %64, %v43
    %v66 = vpop.permute.xlu0 %65
    %69 = vset.pattern.permute.xlu0 0
    %70 = vperm.xlu0 %69, %v44
    %v71 = vpop.permute.xlu0 %70
    %74 = vset.pattern.permute.xlu0 0
    %75 = vperm.xlu0 %74, %v45
    %v76 = vpop.permute.xlu0 %75
    %79 = vset.pattern.permute.xlu0 0
    %80 = vperm.xlu0 %79, %v46
    %v81 = vpop.permute.xlu0 %80
    %84 = vset.pattern.permute.xlu0 0
    %85 = vperm.xlu0 %84, %v47
    %v86 = vpop.permute.xlu0 %85
    %89 = vset.pattern.permute.xlu0 0
    %90 = vperm.xlu0 %89, %v48
    %v91 = vpop.permute.xlu0 %90
    %94 = vset.pattern.permute.xlu0 0
    %95 = vperm.xlu0 %94, %v49
    %v96 = vpop.permute.xlu0 %95
    %99 = vset.pattern.permute.xlu0 0
    %100 = vperm.xlu0 %99, %v50
    %v101 = vpop.permute.xlu0 %100
    %104 = vset.pattern.permute.xlu0 0
    %105 = vperm.xlu0 %104, %v51
    %v106 = vpop.permute.xlu0 %105
    %109 = vset.pattern.permute.xlu0 0
    %110 = vperm.xlu0 %109, %v52
    %v111 = vpop.permute.xlu0 %110
    %114 = vset.pattern.permute.xlu0 0
    %115 = vperm.xlu0 %114, %v53
    %v116 = vpop.permute.xlu0 %115
    %119 = vset.pattern.permute.xlu0 0
    %120 = vperm.xlu0 %119, %v54
    %v121 = vpop.permute.xlu0 %120
    %124 = vset.pattern.permute.xlu0 0
    %125 = vperm.xlu0 %124, %v55
    %v126 = vpop.permute.xlu0 %125
    %129 = vset.pattern.permute.xlu0 0
    %130 = vperm.xlu0 %129, %v56
    %v131 = vpop.permute.xlu0 %130
    %134 = vset.pattern.permute.xlu0 0
    %135 = vperm.xlu0 %134, %v57
    %v136 = vpop.permute.xlu0 %135
    %vm138 = vcmask 261120
    %v140 = vsel %vm138, %v22, 0
    %v143 = vsel %vm138, %v23, 0
    %v146 = vsel %vm138, %v24, 0
    %v149 = vsel %vm138, %v25, 0
    %v152 = vsel %vm138, %v26, 0
    %v155 = vsel %vm138, %v27, 0
    %v158 = vsel %vm138, %v28, 0
    %v161 = vsel %vm138, %v29, 0
    %v164 = vsel %vm138, %v30, 0
    %v167 = vsel %vm138, %v31, 0
    %v170 = vsel %vm138, %v32, 0
    %v173 = vsel %vm138, %v33, 0
    %v176 = vsel %vm138, %v34, 0
    %v179 = vsel %vm138, %v35, 0
    %v182 = vsel %vm138, %v36, 0
    %v185 = vsel %vm138, %v37, 0
    %187 = vmatprep.subr.mxu0 0.0
    %188 = vmatpush1.msra.mxu0 0.0
    %189 = vmatprep.subr.mxu0 0.0
    %190 = vmatpush1.msra.mxu0 0.0
    %191 = vmatprep.subr.mxu0 0.0
    %192 = vmatpush1.msra.mxu0 0.0
    %193 = vmatprep.subr.mxu0 0.0
    %194 = vmatpush1.msra.mxu0 0.0
    %195 = vmatprep.subr.mxu0 0.0
    %196 = vmatpush1.msra.mxu0 0.0
    %197 = vmatprep.subr.mxu0 0.0
    %198 = vmatpush1.msra.mxu0 0.0
    %199 = vmatprep.subr.mxu0 0.0
    %200 = vmatpush1.msra.mxu0 0.0
    %201 = vmatprep.subr.mxu0 0.0
    %202 = vmatpush1.msra.mxu0 0.0
    %203 = vmatprep.subr.mxu0 0.0
    %204 = vmatpush1.msra.mxu0 0.0
    %205 = vmatprep.subr.mxu0 0.0
    %206 = vmatpush1.msra.mxu0 0.0
    %207 = vmatprep.subr.mxu0 0.0
    %208 = vmatpush1.msra.mxu0 0.0
    %209 = vmatprep.subr.mxu0 0.0
    %210 = vmatpush1.msra.mxu0 0.0
    %211 = vmatprep.subr.mxu0 0.0
    %212 = vmatpush1.msra.mxu0 %v41
    %213 = vmatprep.subr.mxu0 0.0
    %214 = vmatpush1.msra.mxu0 %v40
    %215 = vmatprep.subr.mxu0 0.0
    %216 = vmatpush1.msra.mxu0 %v39
    %217 = vmatprep.subr.mxu0 0.0
    %218 = vmatpush1.msra.mxu0 %v38
    %219 = vmatprep.subr.mxu0 0.0
    %220 = vmatpush2.msra.mxu0 0.0
    %221 = vmatprep.subr.mxu0 0.0
    %222 = vmatpush2.msra.mxu0 0.0
    %223 = vmatprep.subr.mxu0 0.0
    %224 = vmatpush2.msra.mxu0 0.0
    %225 = vmatprep.subr.mxu0 0.0
    %226 = vmatpush2.msra.mxu0 0.0
    %227 = vmatprep.subr.mxu0 0.0
    %228 = vmatpush2.msra.mxu0 0.0
    %229 = vmatprep.subr.mxu0 0.0
    %230 = vmatpush2.msra.mxu0 0.0
    %231 = vmatprep.subr.mxu0 0.0
    %232 = vmatpush2.msra.mxu0 0.0
    %233 = vmatprep.subr.mxu0 0.0
    %234 = vmatpush2.msra.mxu0 0.0
    %235 = vmatprep.subr.mxu0 0.0
    %236 = vmatpush2.msra.mxu0 0.0
    %237 = vmatprep.subr.mxu0 0.0
    %238 = vmatpush2.msra.mxu0 0.0
    %239 = vmatprep.subr.mxu0 0.0
    %240 = vmatpush2.msra.mxu0 0.0
    %241 = vmatprep.subr.mxu0 0.0
    %242 = vmatpush2.msra.mxu0 0.0
    %243 = vmatprep.subr.mxu0 0.0
    %244 = vmatpush2.msra.mxu0 0.0
    %245 = vmatprep.subr.mxu0 0.0
    %246 = vmatpush2.msra.mxu0 0.0
    %247 = vmatprep.subr.mxu0 0.0
    %248 = vmatpush2.msra.mxu0 0.0
    %249 = vmatprep.subr.mxu0 0.0
    %250 = vmatpush2.msra.mxu0 0.0
    %251 = vmatprep.mubr.f32.mxu0 0.0
    %252 = vmatmul.mubr.f32.gmra.mxu0 %v140
    %v253 = vpop.f32.mrf.mxu0
    %v254 = vadd.f32 %v61, %v253
    %v255 = vpop.f32.mrf.mxu0
    %256 = vmatprep.mubr.f32.mxu0 0.0
    %257 = vmatmul.mubr.f32.gmra.mxu0 %v143
    %v258 = vpop.f32.mrf.mxu0
    %v259 = vadd.f32 %v66, %v258
    %v260 = vpop.f32.mrf.mxu0
    %261 = vmatprep.mubr.f32.mxu0 0.0
    %262 = vmatmul.mubr.f32.gmra.mxu0 %v146
    %v263 = vpop.f32.mrf.mxu0
    %v264 = vadd.f32 %v71, %v263
    %v265 = vpop.f32.mrf.mxu0
    %266 = vmatprep.mubr.f32.mxu0 0.0
    %267 = vmatmul.mubr.f32.gmra.mxu0 %v149
    %v268 = vpop.f32.mrf.mxu0
    %v269 = vadd.f32 %v76, %v268
    %v270 = vpop.f32.mrf.mxu0
    %271 = vmatprep.mubr.f32.mxu0 0.0
    %272 = vmatmul.mubr.f32.gmra.mxu0 %v152
    %v273 = vpop.f32.mrf.mxu0
    %v274 = vadd.f32 %v81, %v273
    %v275 = vpop.f32.mrf.mxu0
    %276 = vmatprep.mubr.f32.mxu0 0.0
    %277 = vmatmul.mubr.f32.gmra.mxu0 %v155
    %v278 = vpop.f32.mrf.mxu0
    %v279 = vadd.f32 %v86, %v278
    %v280 = vpop.f32.mrf.mxu0
    %281 = vmatprep.mubr.f32.mxu0 0.0
    %282 = vmatmul.mubr.f32.gmra.mxu0 %v158
    %v283 = vpop.f32.mrf.mxu0
    %v284 = vadd.f32 %v91, %v283
    %v285 = vpop.f32.mrf.mxu0
    %286 = vmatprep.mubr.f32.mxu0 0.0
    %287 = vmatmul.mubr.f32.gmra.mxu0 %v161
    %v288 = vpop.f32.mrf.mxu0
    %v289 = vadd.f32 %v96, %v288
    %v290 = vpop.f32.mrf.mxu0
    %291 = vmatprep.mubr.f32.mxu0 0.0
    %292 = vmatmul.mubr.f32.gmra.mxu0 %v164
    %v293 = vpop.f32.mrf.mxu0
    %v294 = vadd.f32 %v101, %v293
    %v295 = vpop.f32.mrf.mxu0
    %296 = vmatprep.mubr.f32.mxu0 0.0
    %297 = vmatmul.mubr.f32.gmra.mxu0 %v167
    %v298 = vpop.f32.mrf.mxu0
    %v299 = vadd.f32 %v106, %v298
    %v300 = vpop.f32.mrf.mxu0
    %301 = vmatprep.mubr.f32.mxu0 0.0
    %302 = vmatmul.mubr.f32.gmra.mxu0 %v170
    %v303 = vpop.f32.mrf.mxu0
    %v304 = vadd.f32 %v111, %v303
    %v305 = vpop.f32.mrf.mxu0
    %306 = vmatprep.mubr.f32.mxu0 0.0
    %307 = vmatmul.mubr.f32.gmra.mxu0 %v173
    %v308 = vpop.f32.mrf.mxu0
    %v309 = vadd.f32 %v116, %v308
    %v310 = vpop.f32.mrf.mxu0
    %311 = vmatprep.mubr.f32.mxu0 0.0
    %312 = vmatmul.mubr.f32.gmra.mxu0 %v176
    %v313 = vpop.f32.mrf.mxu0
    %v314 = vadd.f32 %v121, %v313
    %v315 = vpop.f32.mrf.mxu0
    %316 = vmatprep.mubr.f32.mxu0 0.0
    %317 = vmatmul.mubr.f32.gmra.mxu0 %v179
    %v318 = vpop.f32.mrf.mxu0
    %v319 = vadd.f32 %v126, %v318
    %v320 = vpop.f32.mrf.mxu0
    %321 = vmatprep.mubr.f32.mxu0 0.0
    %322 = vmatmul.mubr.f32.gmra.mxu0 %v182
    %v323 = vpop.f32.mrf.mxu0
    %v324 = vadd.f32 %v131, %v323
    %v325 = vpop.f32.mrf.mxu0
    %326 = vmatprep.mubr.f32.mxu0 0.0
    %327 = vmatmul.mubr.f32.gmra.mxu0 %v185
    %v328 = vpop.f32.mrf.mxu0
    %v329 = vadd.f32 %v136, %v328
    %v330 = vpop.f32.mrf.mxu0
    %331 = vdwg.mxu0
    %v332 = vmax.f32 %v254, 0.0
    %v333 = vmax.f32 %v259, 0.0
    %v334 = vmax.f32 %v264, 0.0
    %v335 = vmax.f32 %v269, 0.0
    %v336 = vmax.f32 %v274, 0.0
    %v337 = vmax.f32 %v279, 0.0
    %v338 = vmax.f32 %v284, 0.0
    %v339 = vmax.f32 %v289, 0.0
    %v340 = vmax.f32 %v294, 0.0
    %v341 = vmax.f32 %v299, 0.0
    %v342 = vmax.f32 %v304, 0.0
    %v343 = vmax.f32 %v309, 0.0
    %v344 = vmax.f32 %v314, 0.0
    %v345 = vmax.f32 %v319, 0.0
    %v346 = vmax.f32 %v324, 0.0
    %v347 = vmax.f32 %v329, 0.0
    %v348 = vld [vmem:[%s3] sm:$0x1]
    %s349 = sld [smem:[#allocation2]]
    %v350 = vstv %s349
    %351 = vmatprep.subr.mxu0 0.0
    %352 = vmatpush1.msra.mxu0 %v347
    %353 = vmatprep.subr.mxu0 0.0
    %354 = vmatpush1.msra.mxu0 %v346
    %355 = vmatprep.subr.mxu0 0.0
    %356 = vmatpush1.msra.mxu0 %v345
    %357 = vmatprep.subr.mxu0 0.0
    %358 = vmatpush1.msra.mxu0 %v344
    %359 = vmatprep.subr.mxu0 0.0
    %360 = vmatpush1.msra.mxu0 %v343
    %361 = vmatprep.subr.mxu0 0.0
    %362 = vmatpush1.msra.mxu0 %v342
    %363 = vmatprep.subr.mxu0 0.0
    %364 = vmatpush1.msra.mxu0 %v341
    %365 = vmatprep.subr.mxu0 0.0
    %366 = vmatpush1.msra.mxu0 %v340
    %367 = vmatprep.subr.mxu0 0.0
    %368 = vmatpush1.msra.mxu0 %v339
    %369 = vmatprep.subr.mxu0 0.0
    %370 = vmatpush1.msra.mxu0 %v338
    %371 = vmatprep.subr.mxu0 0.0
    %372 = vmatpush1.msra.mxu0 %v337
    %373 = vmatprep.subr.mxu0 0.0
    %374 = vmatpush1.msra.mxu0 %v336
    %375 = vmatprep.subr.mxu0 0.0
    %376 = vmatpush1.msra.mxu0 %v335
    %377 = vmatprep.subr.mxu0 0.0
    %378 = vmatpush1.msra.mxu0 %v334
    %379 = vmatprep.subr.mxu0 0.0
    %380 = vmatpush1.msra.mxu0 %v333
    %381 = vmatprep.subr.mxu0 0.0
    %382 = vmatpush1.msra.mxu0 %v332
    %383 = vmatprep.subr.mxu0 0.0
    %384 = vmatpush2.msra.mxu0 0.0
    %385 = vmatprep.subr.mxu0 0.0
    %386 = vmatpush2.msra.mxu0 0.0
    %387 = vmatprep.subr.mxu0 0.0
    %388 = vmatpush2.msra.mxu0 0.0
    %389 = vmatprep.subr.mxu0 0.0
    %390 = vmatpush2.msra.mxu0 0.0
    %391 = vmatprep.subr.mxu0 0.0
    %392 = vmatpush2.msra.mxu0 0.0
    %393 = vmatprep.subr.mxu0 0.0
    %394 = vmatpush2.msra.mxu0 0.0
    %395 = vmatprep.subr.mxu0 0.0
    %396 = vmatpush2.msra.mxu0 0.0
    %397 = vmatprep.subr.mxu0 0.0
    %398 = vmatpush2.msra.mxu0 0.0
    %399 = vmatprep.subr.mxu0 0.0
    %400 = vmatpush2.msra.mxu0 0.0
    %401 = vmatprep.subr.mxu0 0.0
    %402 = vmatpush2.msra.mxu0 0.0
    %403 = vmatprep.subr.mxu0 0.0
    %404 = vmatpush2.msra.mxu0 0.0
    %405 = vmatprep.subr.mxu0 0.0
    %406 = vmatpush2.msra.mxu0 0.0
    %407 = vmatprep.subr.mxu0 0.0
    %408 = vmatpush2.msra.mxu0 0.0
    %409 = vmatprep.subr.mxu0 0.0
    %410 = vmatpush2.msra.mxu0 0.0
    %411 = vmatprep.subr.mxu0 0.0
    %412 = vmatpush2.msra.mxu0 0.0
    %413 = vmatprep.subr.mxu0 0.0
    %414 = vmatpush2.msra.mxu0 0.0
    %415 = vmatprep.mubr.f32.mxu0 0.0
    %416 = vmatmul.mubr.f32.gmra.mxu0 %v348
    %v417 = vpop.f32.mrf.mxu0
    %v418 = vadd.f32 %v350, %v417
    %v419 = vpop.f32.mrf.mxu0
    %420 = vdwg.mxu0
    %421 = vst [vmem:[#allocation3] sm:$0x1] %v418
    // Predicated region
    $region22: #{tpu_custom_call.1} parent=1 // pred_check
      _
    $region23: #{tpu_custom_call.1} parent=1 // pred_check_branch
      %423 = sbr.rel (0) target = $region25
    $region24: #{tpu_custom_call.1} parent=1 // pred_region
      %s425 = ssub.s32 16, 16
      %426 = vsyncadd [#allocation4], %s425
      %s428 = sshll.u32 [#allocation3], 4
      %s429 = int_to_ptr.vmem [resolvable:$true] %s428
      %431 = dma.vmem_to_hbm [thread:$0]  %s429, 16, %s5, [#allocation4]
    $region25: #{tpu_custom_call.1} parent=1 // pred_fallthru
      _
    // Predicated region
    $region26: #{tpu_custom_call.1} parent=1 // pred_check
      _
    $region27: #{tpu_custom_call.1} parent=1 // pred_check_branch
      %433 = sbr.rel (0) target = $region29
    $region28: #{tpu_custom_call.1} parent=1 // pred_region
      %434 = dma.done [#allocation4], 16
    $region29: #{tpu_custom_call.1} parent=1 // pred_fallthru
      _
    %435 = vsyncpa [#allocation4], 1

</llo_original>
